<compile_context>
chip_gen: v5e
topology: v5e:2x2
jax: 0.10.0
libtpu: 0.0.40
codegen_flags: <defaults>
</compile_context>

<pallas_src>
import functools

import jax
import jax.numpy as jnp
from jax import lax
from jax.experimental import pallas as pl
from jax.experimental.pallas import tpu as pltpu


# ------------------------------- kernel ------------------------------------


def _mm_kernel(x_ref, w_ref, o_ref, *scratch, x_is_panel, tk, mxu_dtype):
    # x_ref: (tm, tk) tile or (tm, K) resident panel; w_ref: (tn, tk);
    # o_ref: (tm, tn). scratch: () when the output is f32 (accumulate in-place
    # into the resident output block), (acc_f32,) for narrower output dtypes.
    kk = pl.program_id(3)
    acc_ref = scratch[0] if scratch else o_ref

    @pl.when(kk == 0)
    def _init():
        acc_ref[...] = jnp.zeros_like(acc_ref)

    if x_is_panel:
        start = pl.multiple_of(kk * tk, tk)
        x_tile = x_ref[:, pl.ds(start, tk)]
    else:
        x_tile = x_ref[...]
    w_tile = w_ref[...]

    if mxu_dtype is not None:
        x_tile = x_tile.astype(mxu_dtype)
        w_tile = w_tile.astype(mxu_dtype)

    # NT contraction on the MXU (contract last dims), f32 accumulation;
    # no transpose of the weight tile is materialized.
    acc_ref[...] += lax.dot_general(
        x_tile,
        w_tile,
        dimension_numbers=(((1,), (1,)), ((), ())),
        preferred_element_type=jnp.float32,
    )

    if scratch:
        @pl.when(kk == pl.num_programs(3) - 1)
        def _finalize():
            o_ref[...] = acc_ref[...].astype(o_ref.dtype)


# --------------------------- tiling / planning ------------------------------


def _vmem_capacity_bytes():
    try:
        cap = int(pltpu.get_tpu_info().vmem_capacity_bytes)
        if cap > 0:
            return cap
    except Exception:
        pass
    return 64 << 20  # conservative fallback (v7x per-TensorCore)


def _sublane_granule(dtype):
    # Packed-sublane granule: 8 rows for 32-bit, 16 for 16-bit, 32 for 8-bit.
    return {4: 8, 2: 16, 1: 32}.get(jnp.dtype(dtype).itemsize, 8)


def _pick_tile(dim, target, granule):
    """Largest tile <= target that is a multiple of `granule` and divides `dim`;
    if dim <= target (or no clean divisor exists) use the full dim, which is
    always a legal block size."""
    if dim <= target:
        return dim
    t = (target // granule) * granule
    while t >= granule:
        if dim % t == 0:
            return t
        t -= granule
    return dim


def _plan_tiles(m, n, k, in_dtype, out_dtype, cap):
    in_isz = jnp.dtype(in_dtype).itemsize
    out_isz = jnp.dtype(out_dtype).itemsize
    out_is_f32 = jnp.dtype(out_dtype) == jnp.float32
    m_gran = _sublane_granule(in_dtype)

    # Block-footprint budget per grid step (inputs/outputs double-buffered).
    budget = min(int(cap * 0.72), 100 << 20)
    big_vmem = cap >= (96 << 20)            # v5e/v6e (128 MiB) vs v7x (64 MiB/TC)
    tm_t = 512
    tn_t = 1024 if big_vmem else 512
    tk_t = 2048 if big_vmem else 1024

    while True:
        tm = _pick_tile(m, tm_t, m_gran)
        tn = _pick_tile(n, tn_t, 128)
        tk = _pick_tile(k, tk_t, 128)

        # Resident full-K x panel: fetched once per (r, m-tile) instead of once
        # per (j, kk) step. Only pays off when both K and N are actually split.
        use_panel = (tk < k) and (tn < n) and (tm * k * in_isz <= budget // 6)
        x_block_bytes = tm * (k if use_panel else tk) * in_isz

        needed = (
            2 * x_block_bytes                      # double-buffered x block
            + 2 * tn * tk * in_isz                 # double-buffered w block
            + 2 * tm * tn * out_isz                # double-buffered out block
            + (0 if out_is_f32 else tm * tn * 4)   # f32 accumulator scratch
        )
        if needed <= budget:
            break
        # Shrink the cheapest-to-shrink target first (K, then N, then M).
        if tk_t > 512:
            tk_t //= 2
        elif tn_t > 256:
            tn_t //= 2
        elif tm_t > 256:
            tm_t //= 2
        else:
            break  # full-dim fallback on an awkward shape; best effort
    return tm, tn, tk, use_panel, needed, out_is_f32


# ------------------------------- wrapper ------------------------------------


def mm_forward(x, w, *, mxu_dtype=None, out_dtype=None):
    """x: (r, m, k), w: (r, n, k) -> stacked (r, m, n) with out[i] = x[i] @ w[i].T."""
    r, m, k = x.shape
    r2, n, k2 = w.shape
    assert r == r2 and k == k2

    out_dtype = x.dtype if out_dtype is None else jnp.dtype(out_dtype)
    cap = _vmem_capacity_bytes()
    tm, tn, tk, use_panel, needed, out_is_f32 = _plan_tiles(
        m, n, k, x.dtype, out_dtype, cap)

    grid = (r, m // tm, n // tn, k // tk)

    if use_panel:
        # x panel resident across the (j, kk) inner loops: DMA'd once per (ri, i).
        x_spec = pl.BlockSpec((None, tm, k), lambda ri, i, j, kk: (ri, i, 0))
    else:
        x_spec = pl.BlockSpec((None, tm, tk), lambda ri, i, j, kk: (ri, i, kk))
    w_spec = pl.BlockSpec((None, tn, tk), lambda ri, i, j, kk: (ri, j, kk))
    o_spec = pl.BlockSpec((None, tm, tn), lambda ri, i, j, kk: (ri, i, j))

    scratch_shapes = [] if out_is_f32 else [pltpu.VMEM((tm, tn), jnp.float32)]

    # Never set the limit below the block footprint; ceiling is generation-aware
    # (~100 MiB on 128 MiB v5e/v6e, ~48 MiB on 64 MiB-per-TC v7x).
    ceiling = min(int(cap * 0.78), 100 << 20)
    vmem_limit = int(max(min(2 * needed, ceiling), needed + (2 << 20), 32 << 20))

    kernel = functools.partial(
        _mm_kernel, x_is_panel=use_panel, tk=tk, mxu_dtype=mxu_dtype)

    return pl.pallas_call(
        kernel,
        out_shape=jax.ShapeDtypeStruct((r, m, n), out_dtype),
        grid_spec=pltpu.PrefetchScalarGridSpec(
            num_scalar_prefetch=0,
            grid=grid,
            in_specs=[x_spec, w_spec],
            out_specs=o_spec,
            scratch_shapes=scratch_shapes,
        ),
        compiler_params=pltpu.CompilerParams(
            dimension_semantics=("parallel", "parallel", "parallel", "arbitrary"),
            vmem_limit_bytes=vmem_limit,
        ),
    )(x, w)


def mm_forward_auto(x, w, **kw):
    """Dispatch lane-sparse / tiny problems to plain XLA (masked stores and a
    mostly-idle MXU make a custom kernel pure fixed overhead there)."""
    r, m, k = x.shape
    n = w.shape[1]
    if n < 128 or m < 8 or (m * n * k) < (1 << 18):
        return jnp.einsum("rmk,rnk->rmn", x, w)
    return mm_forward(x, w, **kw)


def mm_forward_list(x, w, **kw):
    """Exact PyTorch return type (list of r (m, n) arrays). Prefer the stacked
    output when possible to avoid r extra HBM slice ops."""
    return list(mm_forward(x, w, **kw))


# --------------------------------- test -------------------------------------


if __name__ == "__main__":
    key = jax.random.PRNGKey(0)

    # Small shapes consistent with the module: r layers, each Linear(k -> n), seq m.
    r, m, k, n = 2, 8, 32, 16
    kx, kw, kx2, kw2 = jax.random.split(key, 4)
    x = jax.random.normal(kx, (r, m, k), dtype=jnp.float32)
    # Deterministic weight init mimicking nn.Linear default: U(-1/sqrt(k), 1/sqrt(k)).
    bound = 1.0 / (k ** 0.5)
    w = jax.random.uniform(kw, (r, n, k), dtype=jnp.float32, minval=-bound, maxval=bound)

    out = jax.block_until_ready(mm_forward(x, w))
    ref = jnp.stack([x[i] @ w[i].T for i in range(r)])
    assert out.shape == (r, m, n)
    assert jnp.allclose(out, ref, atol=1e-5, rtol=1e-5)

    # A second, slightly larger case that exercises the tiled / K-accumulation path.
    r2_, m2, k2_, n2 = 2, 128, 2048, 256
    x2 = jax.random.normal(kx2, (r2_, m2, k2_), dtype=jnp.float32)
    b2 = 1.0 / (k2_ ** 0.5)
    w2 = jax.random.uniform(kw2, (r2_, n2, k2_), dtype=jnp.float32, minval=-b2, maxval=b2)

    out2 = jax.block_until_ready(mm_forward(x2, w2))
    ref2 = jnp.einsum("rmk,rnk->rmn", x2, w2, precision=lax.Precision.HIGHEST)
    assert out2.shape == (r2_, m2, n2)
    assert jnp.allclose(out2, ref2, atol=1e-3, rtol=1e-3)

    print("KERNEL_OK")
</pallas_src>

<mosaic_0001>
module attributes {stable_mosaic.version = 11 : i64} {
  func.func @_mm_kernel(%arg0: i32, %arg1: i32, %arg2: i32, %arg3: i32, %arg4: memref<1x8x32xf32, #tpu.memory_space<vmem>>, %arg5: memref<1x16x32xf32, #tpu.memory_space<vmem>>, %arg6: memref<1x8x16xf32, #tpu.memory_space<vmem>>) attributes {dimension_semantics = [#tpu.dimension_semantics<parallel>, #tpu.dimension_semantics<parallel>, #tpu.dimension_semantics<parallel>, #tpu.dimension_semantics<arbitrary>], iteration_bounds = array<i64: 2, 1, 1, 1>, scalar_prefetch = 0 : i64, scratch_operands = 0 : i64, tpu.core_type = #tpu.core_type<tc>, window_params = [{transform_indices = @transform_0, window_bounds = array<i64: 1, 8, 32>}, {transform_indices = @transform_1, window_bounds = array<i64: 1, 16, 32>}, {transform_indices = @transform_2, window_bounds = array<i64: 1, 8, 16>}]} {
    %c0_i32 = arith.constant 0 : i32
    %0 = arith.cmpi eq, %arg3, %c0_i32 : i32
    %1 = arith.extui %0 : i1 to i32
    %c0_i32_0 = arith.constant 0 : i32
    %2 = arith.cmpi ne, %1, %c0_i32_0 : i32
    scf.if %2 {
      %cst_12 = arith.constant 0.000000e+00 : f32
      %14 = vector.broadcast %cst_12 : f32 to vector<8x16xf32>
      %c0_13 = arith.constant 0 : index
      %c0_14 = arith.constant 0 : index
      %c0_15 = arith.constant 0 : index
      %15 = vector.load %arg6[%c0_13, %c0_14, %c0_15] : memref<1x8x16xf32, #tpu.memory_space<vmem>>, vector<1x8x16xf32>
      %16 = vector.shape_cast %15 : vector<1x8x16xf32> to vector<8x16xf32>
      %17 = vector.shape_cast %14 : vector<8x16xf32> to vector<1x8x16xf32>
      tpu.vector_store %arg6[%c0_13, %c0_14, %c0_15], %17 {strides = array<i32>} : memref<1x8x16xf32, #tpu.memory_space<vmem>>, vector<1x8x16xf32>,
    } else {
    }
    %c0 = arith.constant 0 : index
    %c0_1 = arith.constant 0 : index
    %c0_2 = arith.constant 0 : index
    %3 = vector.load %arg4[%c0, %c0_1, %c0_2] : memref<1x8x32xf32, #tpu.memory_space<vmem>>, vector<1x8x32xf32>
    %4 = vector.shape_cast %3 : vector<1x8x32xf32> to vector<8x32xf32>
    %c0_3 = arith.constant 0 : index
    %c0_4 = arith.constant 0 : index
    %c0_5 = arith.constant 0 : index
    %5 = vector.load %arg5[%c0_3, %c0_4, %c0_5] : memref<1x16x32xf32, #tpu.memory_space<vmem>>, vector<1x16x32xf32>
    %6 = vector.shape_cast %5 : vector<1x16x32xf32> to vector<16x32xf32>
    %c0_6 = arith.constant 0 : index
    %c0_7 = arith.constant 0 : index
    %c0_8 = arith.constant 0 : index
    %7 = vector.load %arg6[%c0_6, %c0_7, %c0_8] : memref<1x8x16xf32, #tpu.memory_space<vmem>>, vector<1x8x16xf32>
    %8 = vector.shape_cast %7 : vector<1x8x16xf32> to vector<8x16xf32>
    %cst = arith.constant dense<0.000000e+00> : vector<8x16xf32>
    %9 = tpu.matmul %4, %6, %cst {dimension_numbers = #tpu.dot_dimension_numbers<[1], [1], [0], [0], [0, 0, 1, 0], [], []>} : vector<8x32xf32>, vector<16x32xf32>, vector<8x16xf32> -> vector<8x16xf32>
    %10 = arith.addf %8, %9 : vector<8x16xf32>
    %c0_9 = arith.constant 0 : index
    %c0_10 = arith.constant 0 : index
    %c0_11 = arith.constant 0 : index
    %11 = vector.load %arg6[%c0_9, %c0_10, %c0_11] : memref<1x8x16xf32, #tpu.memory_space<vmem>>, vector<1x8x16xf32>
    %12 = vector.shape_cast %11 : vector<1x8x16xf32> to vector<8x16xf32>
    %13 = vector.shape_cast %10 : vector<8x16xf32> to vector<1x8x16xf32>
    tpu.vector_store %arg6[%c0_9, %c0_10, %c0_11], %13 {strides = array<i32>} : memref<1x8x16xf32, #tpu.memory_space<vmem>>, vector<1x8x16xf32>,
    return
  }
  func.func @transform_0(%arg0: i32, %arg1: i32, %arg2: i32, %arg3: i32) -> (i32, i32, i32) {
    %c0_i32 = arith.constant 0 : i32
    return %arg0, %arg1, %arg3 : i32, i32, i32
  }
  func.func @transform_1(%arg0: i32, %arg1: i32, %arg2: i32, %arg3: i32) -> (i32, i32, i32) {
    %c0_i32 = arith.constant 0 : i32
    return %arg0, %arg2, %arg3 : i32, i32, i32
  }
  func.func @transform_2(%arg0: i32, %arg1: i32, %arg2: i32, %arg3: i32) -> (i32, i32, i32) {
    %c0_i32 = arith.constant 0 : i32
    return %arg0, %arg1, %arg2 : i32, i32, i32
  }
}

</mosaic_0001>

<llo_original>
// kernel: tpu_custom_call.1
$region0: #{tpu_custom_call.1}
  #allocation0 [shape = 'u32[]', space=smem, size = 0x4, offset = 0x4, fixed_abs, tag = 'smem constant byte address 0x4 - core index']
  #allocation1 [shape = 'u32[72,128]{1,0:T(1,128)}', space=vmem, size = 0x9000, scoped, tag = 'internal scratch']
  %s0 = inlined_call_operand.hbm [shape: f32[2,8,32], index: 0, kind: input, shape index: {}]
  %s1 = inlined_call_operand.hbm [shape: f32[2,16,32], index: 1, kind: input, shape index: {}]
  %s2 = inlined_call_operand.hbm [shape: f32[2,8,16], index: 2, kind: output, shape index: {}]
  %s3 = sld [smem:[#allocation0]]
  $region53: #{tpu_custom_call.1} parent=0
    _
  %s5 = ssub.s32 1, %s3
  %s6 = scalar_select 0, %s5, %s3
  $region1: #{tpu_custom_call.1} parent=0
    #allocation2 [shape = 'u8[8192]{0}', space=vmem, size = 0x2000, scoped, tag = 'input window, operand 0']
    #allocation3 [shape = 's32[2]{0}', space=sflag, size = 0x8, scoped, tag = 'scoped memory for tpu_custom_call.1']
    #allocation4 [shape = 's32[2]{0}', space=sflag, size = 0x8, scoped, tag = 'scoped memory for tpu_custom_call.1']
    #allocation5 [shape = 'u8[16384]{0}', space=vmem, size = 0x4000, scoped, tag = 'input window, operand 1']
    #allocation6 [shape = 's32[2]{0}', space=sflag, size = 0x8, scoped, tag = 'scoped memory for tpu_custom_call.1']
    #allocation7 [shape = 'u8[8192]{0}', space=vmem, size = 0x2000, scoped, tag = 'output window, operand 0']
    %7 = vsyncpa [#allocation3], 0
    %s8 = scalar_lea.sflag [#allocation3], 1
    %9 = vsyncpa %s8, 0
    %10 = vsyncpa [#allocation6], 0
    %s11 = scalar_lea.sflag [#allocation6], 1
    %12 = vsyncpa %s11, 0
    %13 = vsyncpa [#allocation4], 0
    %s14 = scalar_lea.sflag [#allocation4], 1
    %15 = vsyncpa %s14, 0
    loop: start=0, step=1, limit=4
    $region2: #{tpu_custom_call.1} parent=1 // loop_pre_header
      _
    $region3: #{tpu_custom_call.1} parent=1 // loop_header
      %s17 = sphi 0, %s21
      %p18 = scmp.ge.s32.totalorder %s17, 4
      %s24 = sphi 0, %s50
      %s25 = sphi 0, %s46
      %s26 = sphi 0, %s42
      %s27 = sphi 0, %s38
      %s28 = sphi 0, %s24
      %s29 = sphi 0, %s25
      %s30 = sphi 0, %s26
      %s31 = sphi 0, %s27
      %s32 = sphi 0, %s28
      %s33 = sphi 0, %s29
      %s34 = sphi 0, %s30
      %s35 = sphi 0, %s31
      %s57 = sphi 0, %s59
      %s60 = sphi 0, %s57
      %s61 = sphi 0, %s60
      %s77 = sphi 0, %s61
      %s87 = sphi 0, %s89
      %s90 = sphi 0, %s87
      %s91 = sphi 0, %s90
      %s107 = sphi 0, %s91
      %s117 = sphi 0, %s119
      %s120 = sphi 0, %s117
      %s121 = sphi 0, %s120
      %s137 = sphi 0, %s121
    $region4: #{tpu_custom_call.1} parent=1 // loop_header_branch
      %20 = sbr.rel (%p18) target = $region8
    $region5: #{tpu_custom_call.1} parent=1 // loop_body
      %s22 = ssub.s32 %s17, 1
      %s23 = ssub.s32 %s17, 2
      %s36 = sadd.s32 1, %s27
      %p37 = scmp.ge.s32.totalorder %s36, 1
      %s38 = scalar_select %p37, 0, %s36
      %s39 = sadd.s32 1, %s26
      %s40 = scalar_select %p37, %s39, %s26
      %p41 = scmp.ge.s32.totalorder %s40, 1
      %s42 = scalar_select %p41, 0, %s40
      %s43 = sadd.s32 1, %s25
      %s44 = scalar_select %p41, %s43, %s25
      %p45 = scmp.ge.s32.totalorder %s44, 1
      %s46 = scalar_select %p45, 0, %s44
      %s47 = sadd.s32 1, %s24
      %s48 = scalar_select %p45, %s47, %s24
      %p49 = scmp.ge.s32.totalorder %s48, 2
      %s50 = scalar_select %p49, 0, %s48
      %s51 = ssub.s32 %s24, %s50
      %s52 = ssub.s32 %s25, %s46
      %s53 = sor.u32 %s51, %s52
      %s54 = ssub.s32 %s27, %s38
      %s55 = sor.u32 %s53, %s54
      %p56 = scmp.eq.s32.totalorder %s55, 0
      %s58 = sadd.s32 %s57, 1
      %s59 = scalar_select %p56, %s57, %s58
      %p62 = pneg %p56
      %p63 = scmp.eq.s32.totalorder %s17, 1
      %p64 = por %p62, %p63
      %p65 = scmp.ne.s32.totalorder %s57, %s60
      %p66 = scmp.eq.s32.totalorder %s17, 0
      %p67 = por %p65, %p66
      %p68 = scmp.ne.s32.totalorder %s57, %s60
      %p69 = scmp.eq.s32.totalorder %s22, 1
      %p70 = por %p68, %p69
      %p71 = scmp.ne.s32.totalorder %s60, %s61
      %p72 = scmp.eq.s32.totalorder %s22, 0
      %p73 = por %p71, %p72
      %p74 = scmp.ne.s32.totalorder %s60, %s61
      %p75 = scmp.eq.s32.totalorder %s23, 1
      %p76 = por %p74, %p75
      %p78 = scmp.ne.s32.totalorder %s61, %s77
      %p79 = scmp.eq.s32.totalorder %s23, 0
      %p80 = por %p78, %p79
      %s81 = ssub.s32 %s24, %s50
      %s82 = ssub.s32 %s26, %s42
      %s83 = sor.u32 %s81, %s82
      %s84 = ssub.s32 %s27, %s38
      %s85 = sor.u32 %s83, %s84
      %p86 = scmp.eq.s32.totalorder %s85, 0
      %s88 = sadd.s32 %s87, 1
      %s89 = scalar_select %p86, %s87, %s88
      %p92 = pneg %p86
      %p93 = scmp.eq.s32.totalorder %s17, 1
      %p94 = por %p92, %p93
      %p95 = scmp.ne.s32.totalorder %s87, %s90
      %p96 = scmp.eq.s32.totalorder %s17, 0
      %p97 = por %p95, %p96
      %p98 = scmp.ne.s32.totalorder %s87, %s90
      %p99 = scmp.eq.s32.totalorder %s22, 1
      %p100 = por %p98, %p99
      %p101 = scmp.ne.s32.totalorder %s90, %s91
      %p102 = scmp.eq.s32.totalorder %s22, 0
      %p103 = por %p101, %p102
      %p104 = scmp.ne.s32.totalorder %s90, %s91
      %p105 = scmp.eq.s32.totalorder %s23, 1
      %p106 = por %p104, %p105
      %p108 = scmp.ne.s32.totalorder %s91, %s107
      %p109 = scmp.eq.s32.totalorder %s23, 0
      %p110 = por %p108, %p109
      %s111 = ssub.s32 %s24, %s50
      %s112 = ssub.s32 %s25, %s46
      %s113 = sor.u32 %s111, %s112
      %s114 = ssub.s32 %s26, %s42
      %s115 = sor.u32 %s113, %s114
      %p116 = scmp.eq.s32.totalorder %s115, 0
      %s118 = sadd.s32 %s117, 1
      %s119 = scalar_select %p116, %s117, %s118
      %p122 = pneg %p116
      %p123 = scmp.eq.s32.totalorder %s17, 1
      %p124 = por %p122, %p123
      %p125 = scmp.ne.s32.totalorder %s117, %s120
      %p126 = scmp.eq.s32.totalorder %s17, 0
      %p127 = por %p125, %p126
      %p128 = scmp.ne.s32.totalorder %s117, %s120
      %p129 = scmp.eq.s32.totalorder %s22, 1
      %p130 = por %p128, %p129
      %p131 = scmp.ne.s32.totalorder %s120, %s121
      %p132 = scmp.eq.s32.totalorder %s22, 0
      %p133 = por %p131, %p132
      %p134 = scmp.ne.s32.totalorder %s120, %s121
      %p135 = scmp.eq.s32.totalorder %s23, 1
      %p136 = por %p134, %p135
      %p138 = scmp.ne.s32.totalorder %s121, %s137
      %p139 = scmp.eq.s32.totalorder %s23, 0
      %p140 = por %p138, %p139
      %p141 = scmp.le.s32.totalorder 1, %s17
      %p142 = scmp.lt.s32.totalorder %s17, 3
      %p143 = pnand %p141, %p142
      %p144 = pneg %p143
      // Predicated region
      $region9: #{tpu_custom_call.1} parent=5 // pred_check
        _
      $region10: #{tpu_custom_call.1} parent=5 // pred_check_branch
        %146 = sbr.rel (%p143) target = $region12
      $region11: #{tpu_custom_call.1} parent=5 // pred_region
        %s147 = ssub.s32 %s17, 1
      $region12: #{tpu_custom_call.1} parent=5 // pred_fallthru
        _
      %p148 = scmp.lt.s32.totalorder %s17, 2
      // Predicated region
      $region13: #{tpu_custom_call.1} parent=5 // pred_check
        %p149 = pneg %p148
      $region14: #{tpu_custom_call.1} parent=5 // pred_check_branch
        %151 = sbr.rel (%p149) target = $region16
      $region15: #{tpu_custom_call.1} parent=5 // pred_region
        // Predicated region
        $region17: #{tpu_custom_call.1} parent=15 // pred_check
          %p152 = pneg %p67
        $region18: #{tpu_custom_call.1} parent=15 // pred_check_branch
          %154 = sbr.rel (%p152) target = $region20
        $region19: #{tpu_custom_call.1} parent=15 // pred_region
          %s155 = sand.u32 %s57, 1
          %s156 = scalar_lea.sflag [#allocation3], %s155
          %s157 = sand.u32 %s57, 1
          %s158 = smul.addr %s157, 8
          %s159 = scalar_lea.vmem [#allocation2], %s158
          %161 = vsyncadd %s156, 0
          %s162 = sadd.s32 %s27, %s25
          %s163 = sadd.s32 %s162, %s24
          %s164 = smul.addr %s163, 8
          %s165 = scalar_lea.hbm %s0, %s164
          %s167 = sshll.u32 %s165, 4
          %s168 = int_to_ptr.hbm [resolvable:$true] %s167
          %s169 = sshll.u32 %s159, 4
          %s170 = int_to_ptr.vmem [resolvable:$true] %s169
          %172 = dma.hbm_to_vmem [thread:$0]  %s168, 128, %s170, %s156
        $region20: #{tpu_custom_call.1} parent=15 // pred_fallthru
          _
        // Predicated region
        $region21: #{tpu_custom_call.1} parent=15 // pred_check
          %p173 = pneg %p97
        $region22: #{tpu_custom_call.1} parent=15 // pred_check_branch
          %175 = sbr.rel (%p173) target = $region24
        $region23: #{tpu_custom_call.1} parent=15 // pred_region
          %s176 = sand.u32 %s87, 1
          %s177 = scalar_lea.sflag [#allocation6], %s176
          %s178 = sand.u32 %s87, 1
          %s179 = smul.addr %s178, 16
          %s180 = scalar_lea.vmem [#allocation5], %s179
          %s181 = smul.u32 2, %s26
          %183 = vsyncadd %s177, 0
          %s184 = sadd.s32 %s27, %s181
          %s185 = smul.addr %s24, 2
          %s186 = sadd.s32 %s184, %s185
          %s187 = smul.addr %s186, 8
          %s188 = scalar_lea.hbm %s1, %s187
          %s189 = sshll.u32 %s188, 4
          %s190 = int_to_ptr.hbm [resolvable:$true] %s189
          %s191 = sshll.u32 %s180, 4
          %s192 = int_to_ptr.vmem [resolvable:$true] %s191
          %197 = dma.hbm_to_vmem [thread:$0]  %s190, 256, %s192, %s177, 128, 128, 8
        $region24: #{tpu_custom_call.1} parent=15 // pred_fallthru
          _
      $region16: #{tpu_custom_call.1} parent=5 // pred_fallthru
        _
      %p198 = scmp.le.s32.totalorder 1, %s17
      %p199 = scmp.lt.s32.totalorder %s17, 3
      %p200 = pnand %p198, %p199
      %p201 = pneg %p200
      // Predicated region
      $region25: #{tpu_custom_call.1} parent=5 // pred_check
        _
      $region26: #{tpu_custom_call.1} parent=5 // pred_check_branch
        %203 = sbr.rel (%p200) target = $region28
      $region27: #{tpu_custom_call.1} parent=5 // pred_region
        %s204 = ssub.s32 %s17, 1
        %s205 = sand.u32 %s60, 1
        %s206 = scalar_lea.sflag [#allocation3], %s205
        %s207 = sand.u32 %s60, 1
        %s208 = smul.addr %s207, 8
        %s209 = scalar_lea.vmem [#allocation2], %s208
        // Predicated region
        $region29: #{tpu_custom_call.1} parent=27 // pred_check
          %p210 = pneg %p73
        $region30: #{tpu_custom_call.1} parent=27 // pred_check_branch
          %212 = sbr.rel (%p210) target = $region32
        $region31: #{tpu_custom_call.1} parent=27 // pred_region
          %214 = dma.done %s206, 128
        $region32: #{tpu_custom_call.1} parent=27 // pred_fallthru
          _
        %s215 = sand.u32 %s90, 1
        %s216 = scalar_lea.sflag [#allocation6], %s215
        %s217 = sand.u32 %s90, 1
        %s218 = smul.addr %s217, 16
        %s219 = scalar_lea.vmem [#allocation5], %s218
        // Predicated region
        $region33: #{tpu_custom_call.1} parent=27 // pred_check
          %p220 = pneg %p103
        $region34: #{tpu_custom_call.1} parent=27 // pred_check_branch
          %222 = sbr.rel (%p220) target = $region36
        $region35: #{tpu_custom_call.1} parent=27 // pred_region
          %224 = dma.done %s216, 256
        $region36: #{tpu_custom_call.1} parent=27 // pred_fallthru
          _
        %s225 = sand.u32 %s60, 1
        %s226 = scalar_lea.sflag [#allocation3], %s225
        %s227 = sand.u32 %s60, 1
        %s228 = smul.addr %s227, 8
        %s229 = scalar_lea.vmem [#allocation2], %s228
        %p230 = pneg %p73
        %p231 = pneg %p70
        %s232 = sand.u32 %s90, 1
        %s233 = scalar_lea.sflag [#allocation6], %s232
        %s234 = sand.u32 %s90, 1
        %s235 = smul.addr %s234, 16
        %s236 = scalar_lea.vmem [#allocation5], %s235
        %p237 = pneg %p103
        %p238 = pneg %p100
        %p239 = pneg %p133
        %p240 = pneg %p130
        %s241 = sand.u32 %s120, 1
        %s242 = scalar_lea.sflag [#allocation4], %s241
        %s243 = sand.u32 %s120, 1
        %s244 = smul.addr %s243, 8
        %s245 = scalar_lea.vmem [#allocation7], %s244
        %s246 = smul.u32 2, %s30
        %p247 = scmp.eq.s32.totalorder %s31, 0
        // Predicated region
        $region37: #{tpu_custom_call.1} parent=27 // pred_check
          %p248 = pneg %p247
        $region38: #{tpu_custom_call.1} parent=27 // pred_check_branch
          %250 = sbr.rel (%p248) target = $region40
        $region39: #{tpu_custom_call.1} parent=27 // pred_region
          %vm251 = vcmask 130048
          %252 = vst.msk [vmem:[%s245] sm:$0xff] %vm251, 0.0
        $region40: #{tpu_custom_call.1} parent=27 // pred_fallthru
          _
        %v253 = vld [vmem:[%s209] sm:$0xff]
        %v254 = vld [vmem:[%s219] sm:$0xff]
        %v255 = vld [vmem:[%s219 + $0x8] sm:$0xff]
        %v256 = vld [vmem:[%s245] sm:$0xff]
        %vm257 = vcmask 261120
        %v259 = vsel %vm257, %v253, 0
        %v262 = vsel %vm257, %v254, 0
        %v265 = vsel %vm257, %v255, 0
        %267 = vmatpush.xpose.msra.mxu0 0.0
        %268 = vmatpush.xpose.msra.mxu0 0.0
        %269 = vmatpush.xpose.msra.mxu0 0.0
        %270 = vmatpush.xpose.msra.mxu0 0.0
        %271 = vmatpush.xpose.msra.mxu0 0.0
        %272 = vmatpush.xpose.msra.mxu0 0.0
        %273 = vmatpush.xpose.msra.mxu0 0.0
        %274 = vmatpush.xpose.msra.mxu0 0.0
        %275 = vmatpush.xpose.msra.mxu0 0.0
        %276 = vmatpush.xpose.msra.mxu0 0.0
        %277 = vmatpush.xpose.msra.mxu0 0.0
        %278 = vmatpush.xpose.msra.mxu0 0.0
        %279 = vmatpush.xpose.msra.mxu0 0.0
        %280 = vmatpush.xpose.msra.mxu0 0.0
        %281 = vmatpush.xpose.msra.mxu0 %v265
        %282 = vmatpush.xpose.msra.mxu0 %v262
        %283 = vmatmul.f32.gmra.mxu0 %v259
        %v284 = vpop.f32.mrf.mxu0
        %v285 = vadd.f32 0.0, %v284
        %286 = vdwg.mxu0
        %v287 = vadd.f32 %v256, %v285
        %vm288 = vcmask 130048
        %289 = vst.msk [vmem:[%s245] sm:$0xff] %vm288, %v287
        %s290 = sand.u32 %s120, 1
        %s291 = scalar_lea.sflag [#allocation4], %s290
        %s292 = sand.u32 %s120, 1
        %s293 = smul.addr %s292, 8
        %s294 = scalar_lea.vmem [#allocation7], %s293
        // Predicated region
        $region41: #{tpu_custom_call.1} parent=27 // pred_check
          %p295 = pneg %p130
        $region42: #{tpu_custom_call.1} parent=27 // pred_check_branch
          %297 = sbr.rel (%p295) target = $region44
        $region43: #{tpu_custom_call.1} parent=27 // pred_region
          %299 = vsyncadd %s291, 0
          %s300 = sadd.s32 %s30, %s29
          %s301 = sadd.s32 %s300, %s28
          %s302 = smul.addr %s301, 8
          %s303 = scalar_lea.hbm %s2, %s302
          %s305 = sshll.u32 %s294, 4
          %s306 = int_to_ptr.vmem [resolvable:$true] %s305
          %s307 = sshll.u32 %s303, 4
          %s308 = int_to_ptr.hbm [resolvable:$true] %s307
          %310 = dma.vmem_to_hbm [thread:$0]  %s306, 128, %s308, %s291
        $region44: #{tpu_custom_call.1} parent=27 // pred_fallthru
          _
      $region28: #{tpu_custom_call.1} parent=5 // pred_fallthru
        _
      %p311 = scmp.le.s32.totalorder 2, %s17
      // Predicated region
      $region45: #{tpu_custom_call.1} parent=5 // pred_check
        %p312 = pneg %p311
      $region46: #{tpu_custom_call.1} parent=5 // pred_check_branch
        %314 = sbr.rel (%p312) target = $region48
      $region47: #{tpu_custom_call.1} parent=5 // pred_region
        %s315 = ssub.s32 %s17, 2
        // Predicated region
        $region49: #{tpu_custom_call.1} parent=47 // pred_check
          %p316 = pneg %p136
        $region50: #{tpu_custom_call.1} parent=47 // pred_check_branch
          %318 = sbr.rel (%p316) target = $region52
        $region51: #{tpu_custom_call.1} parent=47 // pred_region
          %s319 = sand.u32 %s121, 1
          %s320 = scalar_lea.sflag [#allocation4], %s319
          %s321 = sand.u32 %s121, 1
          %s322 = smul.addr %s321, 8
          %s323 = scalar_lea.vmem [#allocation7], %s322
          %325 = dma.done %s320, 128
        $region52: #{tpu_custom_call.1} parent=47 // pred_fallthru
          _
      $region48: #{tpu_custom_call.1} parent=5 // pred_fallthru
        _
    $region6: #{tpu_custom_call.1} parent=1 // loop_footer
      %s21 = sadd.s32 1, %s17
    $region7: #{tpu_custom_call.1} parent=1 // loop_footer_branch
      %16 = sbr.rel target = $region3
    $region8: #{tpu_custom_call.1} parent=1 // loop_exit
      _
    %326 = vsyncpa [#allocation3], 1
    %s327 = scalar_lea.sflag [#allocation3], 1
    %328 = vsyncpa %s327, 1
    %329 = vsyncpa [#allocation6], 1
    %s330 = scalar_lea.sflag [#allocation6], 1
    %331 = vsyncpa %s330, 1
    %332 = vsyncpa [#allocation4], 1
    %s333 = scalar_lea.sflag [#allocation4], 1
    %334 = vsyncpa %s333, 1

</llo_original>
